<compile_context>
chip_gen: v6e
topology: v6e:2x2x1
jax: 0.10.0
libtpu: 0.0.40
codegen_flags: <defaults>
</compile_context>

<pallas_src>
import jax
import jax.numpy as jnp
from jax import lax
from jax.experimental import pallas as pl
from jax.experimental.pallas import tpu as pltpu

LANE = 128                      # lane width for the padded (lane-dense) logit output
MATMUL_DTYPE = jnp.bfloat16     # activation / projection-weight operand dtype (f32 accumulation)


# --------------------------------------------------------------------------- kernel
def simple_classifier_kernel(
    tweet_ref,   # (TB, D)     bf16
    uh_ref,      # (TB, T, D)  bf16   user_h
    mh_ref,      # (TB, T, D)  bf16   ment_h
    u_wq_ref,    # (D, D)      bf16
    u_wk_ref,    # (D, D)      bf16
    u_bqk_ref,   # (1, D)      f32    u_bq + u_bk
    u_v_ref,     # (D, 1)      f32
    m_wq_ref,    # (D, D)      bf16
    m_wk_ref,    # (D, D)      bf16
    m_bqk_ref,   # (1, D)      f32    m_bq + m_bk
    m_v_ref,     # (D, 1)      f32
    wo_ref,      # (D, LANE)   f32    col 0 = w_out, rest 0
    bo_ref,      # (1, LANE)   f32    col 0 = b_out, rest 0
    out_ref,     # (TB, LANE)  f32
):
    tweet = tweet_ref[...]                                                   # (TB, D) bf16

    def attend(h_ref, wq_ref, wk_ref, bqk_ref, v_ref):
        h = h_ref[...]                                                       # (TB, T, D) bf16
        # query / key projections on the MXU (bf16 operands, f32 accumulation)
        q = jnp.dot(tweet, wq_ref[...],
                    preferred_element_type=jnp.float32) + bqk_ref[...]       # (TB, D) f32
        k = lax.dot_general(h, wk_ref[...],
                            dimension_numbers=(((2,), (0,)), ((), ())),
                            preferred_element_type=jnp.float32)              # (TB, T, D) f32
        e = jnp.tanh(q[:, None, :] + k)                                      # (TB, T, D) f32
        # attention scores: one small MXU dot (b_v folded away, softmax-invariant)
        s = lax.dot_general(e, v_ref[...],
                            dimension_numbers=(((2,), (0,)), ((), ())),
                            preferred_element_type=jnp.float32)              # (TB, T, 1) f32
        # softmax over T (sublane axis); divide on the EUP
        s_max = jnp.max(s, axis=1, keepdims=True)                            # (TB, 1, 1)
        p = jnp.exp(s - s_max)                                               # (TB, T, 1)
        denom = jnp.sum(p, axis=1, keepdims=True)                            # (TB, 1, 1)
        alpha = p * pl.reciprocal(denom, approx=True)                        # (TB, T, 1)
        # context = sum_T alpha * h   (f32 accumulation; cheap VPU mult + sublane reduce
        # for small T — MXU has plenty of slack while the kernel is mem-bound)
        return jnp.sum(alpha * h.astype(jnp.float32), axis=1)                # (TB, D) f32

    ctx_u = attend(uh_ref, u_wq_ref, u_wk_ref, u_bqk_ref, u_v_ref)
    ctx_m = attend(mh_ref, m_wq_ref, m_wk_ref, m_bqk_ref, m_v_ref)
    hidden = ctx_u + ctx_m + tweet.astype(jnp.float32)                       # (TB, D) f32

    # logits = hidden @ w_out + b_out, emitted lane-dense (col 0 carries the logit).
    out_ref[...] = (jnp.dot(hidden, wo_ref[...],
                            preferred_element_type=jnp.float32) + bo_ref[...])


# --------------------------------------------------------------------------- sizing helpers
def _vmem_capacity_bytes():
    """Per-core VMEM capacity; conservative fallback = v7x (64 MiB per TensorCore)."""
    try:
        return int(pltpu.get_tpu_info().vmem_capacity_bytes)
    except Exception:
        return 64 << 20


def _pick_tile(T, D, budget_bytes):
    """Largest batch tile whose working set (double-buffered bf16 input blocks, f32 out
    block, live f32 intermediates and lane-padded narrow softmax values) fits budget."""
    t_pad = ((T + 7) // 8) * 8
    per_row = (
        2 * D * 2                     # tweet block, bf16, x2 pipeline buffers
        + 2 * 2 * T * D * 2           # user_h + ment_h blocks, bf16, x2 buffers
        + 2 * LANE * 4                # padded logits block, f32, x2 buffers
        + 6 * T * D * 4               # dense f32 intermediates (k, e, alpha*h) per branch
        + 4 * t_pad * LANE * 4        # narrow (TB,T,1) score/softmax values (lane-padded)
    )
    tb = (budget_bytes // per_row) // 8 * 8
    return int(max(8, min(tb, 2048)))


# --------------------------------------------------------------------------- wrapper
def _fuse_params(params):
    """Fold biases and pad the output FC into MXU/lane-friendly fused weights."""
    f32 = jnp.float32

    def branch(p):
        wq = params[p + "_wq"].astype(MATMUL_DTYPE)                  # (D, D) bf16
        wk = params[p + "_wk"].astype(MATMUL_DTYPE)                  # (D, D) bf16
        bqk = (params[p + "_bq"] + params[p + "_bk"]).astype(f32)    # (1, D) (b_v dropped)
        v = params[p + "_v"].astype(f32)                             # (D, 1)
        return wq, wk, bqk, v

    u = branch("u")
    m = branch("m")
    D = params["w_out"].shape[0]
    wo = jnp.zeros((D, LANE), f32).at[:, 0:1].set(params["w_out"])   # lane-dense output weight
    bo = jnp.zeros((1, LANE), f32).at[:, 0:1].set(params["b_out"])
    return (*u, *m, wo, bo)


@jax.jit
def simple_classifier(tweet, user_h, ment_h, params):
    B, D = tweet.shape
    T = user_h.shape[1]

    cap = _vmem_capacity_bytes()
    budget = min(int(cap * 0.40), 40 << 20)       # working-set budget (v7x-safe)
    vmem_limit = min(int(cap * 0.75), 64 << 20)

    TB = _pick_tile(T, D, budget)
    if B <= TB:
        # Whole batch fits one tile: still keep >= 2 grid steps when possible so the
        # "parallel" axis can shard across v7x's two TensorCores and the pipeline has
        # an i+1 step to prefetch.  Tiny batches run as a single full-extent block.
        TB = max(8, (B // 2) // 8 * 8) if B >= 16 else B
    B_pad = pl.cdiv(B, TB) * TB
    pad = B_pad - B

    # Ship activations as bf16 (halves the dominant HBM stream).  Upstream producers
    # should emit bf16 directly; the cast here is a no-op in that case.
    tweet_k = tweet.astype(MATMUL_DTYPE)
    uh_k = user_h.astype(MATMUL_DTYPE)
    mh_k = ment_h.astype(MATMUL_DTYPE)
    if pad:
        tweet_k = jnp.pad(tweet_k, ((0, pad), (0, 0)))
        uh_k = jnp.pad(uh_k, ((0, pad), (0, 0), (0, 0)))
        mh_k = jnp.pad(mh_k, ((0, pad), (0, 0), (0, 0)))

    fused = _fuse_params(params)

    def wspec(shape):
        return pl.BlockSpec(shape, lambda i: (0, 0))   # VMEM-resident weights

    flops = int(2 * B_pad * (2 * D * D            # q projections (both branches)
                             + 2 * T * D * D      # k projections
                             + 2 * T * D          # score dots
                             + 2 * T * D          # alpha*h + T reduction
                             + D * LANE))         # padded output fc
    transcendentals = int(B_pad * (2 * T * D + 2 * T))       # tanh + exp
    bytes_accessed = int(2 * B_pad * (D + 2 * T * D)         # bf16 activations in
                         + 4 * B_pad * LANE                  # f32 padded logits out
                         + 2 * 4 * D * D                     # bf16 wq/wk (both branches)
                         + 4 * (4 * D + 2 + D * LANE + LANE))

    out = pl.pallas_call(
        simple_classifier_kernel,
        out_shape=jax.ShapeDtypeStruct((B_pad, LANE), jnp.float32),
        grid=(B_pad // TB,),
        in_specs=[
            pl.BlockSpec((TB, D), lambda i: (i, 0)),            # tweet
            pl.BlockSpec((TB, T, D), lambda i: (i, 0, 0)),      # user_h
            pl.BlockSpec((TB, T, D), lambda i: (i, 0, 0)),      # ment_h
            wspec((D, D)), wspec((D, D)), wspec((1, D)), wspec((D, 1)),   # user branch
            wspec((D, D)), wspec((D, D)), wspec((1, D)), wspec((D, 1)),   # ment branch
            wspec((D, LANE)), wspec((1, LANE)),                           # output fc
        ],
        out_specs=pl.BlockSpec((TB, LANE), lambda i: (i, 0)),
        compiler_params=pltpu.CompilerParams(
            dimension_semantics=("parallel",),
            vmem_limit_bytes=vmem_limit),
        cost_estimate=pl.CostEstimate(flops=flops,
                                      transcendentals=transcendentals,
                                      bytes_accessed=bytes_accessed),
    )(tweet_k, uh_k, mh_k, *fused)

    return out[:B, :1]                                           # (B, 1)


# --------------------------------------------------------------------------- params / reference
def init_params(key, d_embed):
    ks = jax.random.split(key, 14)

    def uni(k, shape, fan_in):
        bound = 1.0 / jnp.sqrt(fan_in)
        return jax.random.uniform(k, shape, jnp.float32, -bound, bound)

    xav = jnp.sqrt(6.0 / (d_embed + 1))
    return {
        # user AddAttention
        "u_wq": uni(ks[0], (d_embed, d_embed), d_embed),
        "u_bq": uni(ks[1], (1, d_embed), d_embed),
        "u_wk": uni(ks[2], (d_embed, d_embed), d_embed),
        "u_bk": uni(ks[3], (1, d_embed), d_embed),
        "u_v":  uni(ks[4], (d_embed, 1), d_embed),
        "u_bv": uni(ks[5], (1, 1), d_embed),
        # ment AddAttention
        "m_wq": uni(ks[6], (d_embed, d_embed), d_embed),
        "m_bq": uni(ks[7], (1, d_embed), d_embed),
        "m_wk": uni(ks[8], (d_embed, d_embed), d_embed),
        "m_bk": uni(ks[9], (1, d_embed), d_embed),
        "m_v":  uni(ks[10], (d_embed, 1), d_embed),
        "m_bv": uni(ks[11], (1, 1), d_embed),
        # output_fc (xavier_uniform_ weight, shape (D, 1) = transposed torch (1, D))
        "w_out": jax.random.uniform(ks[12], (d_embed, 1), jnp.float32, -xav, xav),
        "b_out": uni(ks[13], (1, 1), d_embed),
    }


def reference(tweet, user_h, ment_h, p):
    """Pure-JAX f32 reference of the same forward math."""
    def attn(h, wq, bq, wk, bk, v, bv):
        q = tweet @ wq + bq                                       # (B, D)
        k = jnp.einsum("btd,de->bte", h, wk) + bk                 # (B, T, D)
        e = jnp.tanh(q[:, None, :] + k)                           # (B, T, D)
        s = jnp.einsum("btd,do->bto", e, v)[..., 0] + bv          # (B, T)
        a = jax.nn.softmax(s, axis=-1)
        return jnp.sum(a[:, :, None] * h, axis=1)                 # (B, D)

    uc = attn(user_h, p["u_wq"], p["u_bq"], p["u_wk"], p["u_bk"], p["u_v"], p["u_bv"])
    mc = attn(ment_h, p["m_wq"], p["m_bq"], p["m_wk"], p["m_bk"], p["m_v"], p["m_bv"])
    hidden = uc + mc + tweet
    return hidden @ p["w_out"] + p["b_out"]


# --------------------------------------------------------------------------- main
if __name__ == "__main__":
    B, T, D = 4, 8, 32          # batch, #users/#mentions per tweet, d_embed
    key = jax.random.PRNGKey(0)
    k_t, k_u, k_m, k_p = jax.random.split(key, 4)

    tweet = jax.random.normal(k_t, (B, D), jnp.float32)
    user_h = jax.random.normal(k_u, (B, T, D), jnp.float32)
    ment_h = jax.random.normal(k_m, (B, T, D), jnp.float32)
    params = init_params(k_p, D)

    logits = simple_classifier(tweet, user_h, ment_h, params)
    jax.block_until_ready(logits)

    # Reference on the same bf16-quantized activations the kernel ingests
    # (kernel-internal error: bf16 projection weights + approx reciprocal only).
    qz = lambda x: x.astype(jnp.bfloat16).astype(jnp.float32)
    ref = reference(qz(tweet), qz(user_h), qz(ment_h), params)

    assert logits.shape == (B, 1)
    assert bool(jnp.allclose(logits, ref, atol=5e-2, rtol=5e-2)), (logits, ref)

    print("KERNEL_OK")
</pallas_src>

<mosaic_0001>
module attributes {stable_mosaic.version = 11 : i64} {
  func.func @simple_classifier_kernel(%arg0: i32, %arg1: memref<4x32xbf16, #tpu.memory_space<vmem>>, %arg2: memref<4x8x32xbf16, #tpu.memory_space<vmem>>, %arg3: memref<4x8x32xbf16, #tpu.memory_space<vmem>>, %arg4: memref<32x32xbf16, #tpu.memory_space<vmem>>, %arg5: memref<32x32xbf16, #tpu.memory_space<vmem>>, %arg6: memref<1x32xf32, #tpu.memory_space<vmem>>, %arg7: memref<32x1xf32, #tpu.memory_space<vmem>>, %arg8: memref<32x32xbf16, #tpu.memory_space<vmem>>, %arg9: memref<32x32xbf16, #tpu.memory_space<vmem>>, %arg10: memref<1x32xf32, #tpu.memory_space<vmem>>, %arg11: memref<32x1xf32, #tpu.memory_space<vmem>>, %arg12: memref<32x128xf32, #tpu.memory_space<vmem>>, %arg13: memref<1x128xf32, #tpu.memory_space<vmem>>, %arg14: memref<4x128xf32, #tpu.memory_space<vmem>>) attributes {dimension_semantics = [#tpu.dimension_semantics<parallel>], iteration_bounds = array<i64: 1>, scalar_prefetch = 0 : i64, scratch_operands = 0 : i64, tpu.core_type = #tpu.core_type<tc>, window_params = [{transform_indices = @transform_0, window_bounds = array<i64: 4, 32>}, {transform_indices = @transform_1, window_bounds = array<i64: 4, 8, 32>}, {transform_indices = @transform_2, window_bounds = array<i64: 4, 8, 32>}, {pipeline_mode = #tpu.pipeline_mode<synchronous>, transform_indices = @transform_3, window_bounds = array<i64: 32, 32>}, {pipeline_mode = #tpu.pipeline_mode<synchronous>, transform_indices = @transform_4, window_bounds = array<i64: 32, 32>}, {pipeline_mode = #tpu.pipeline_mode<synchronous>, transform_indices = @transform_5, window_bounds = array<i64: 1, 32>}, {pipeline_mode = #tpu.pipeline_mode<synchronous>, transform_indices = @transform_6, window_bounds = array<i64: 32, 1>}, {pipeline_mode = #tpu.pipeline_mode<synchronous>, transform_indices = @transform_7, window_bounds = array<i64: 32, 32>}, {pipeline_mode = #tpu.pipeline_mode<synchronous>, transform_indices = @transform_8, window_bounds = array<i64: 32, 32>}, {pipeline_mode = #tpu.pipeline_mode<synchronous>, transform_indices = @transform_9, window_bounds = array<i64: 1, 32>}, {pipeline_mode = #tpu.pipeline_mode<synchronous>, transform_indices = @transform_10, window_bounds = array<i64: 32, 1>}, {pipeline_mode = #tpu.pipeline_mode<synchronous>, transform_indices = @transform_11, window_bounds = array<i64: 32, 128>}, {pipeline_mode = #tpu.pipeline_mode<synchronous>, transform_indices = @transform_12, window_bounds = array<i64: 1, 128>}, {transform_indices = @transform_13, window_bounds = array<i64: 4, 128>}]} {
    %c0 = arith.constant 0 : index
    %c0_0 = arith.constant 0 : index
    %0 = vector.load %arg1[%c0, %c0_0] : memref<4x32xbf16, #tpu.memory_space<vmem>>, vector<4x32xbf16>
    %c0_1 = arith.constant 0 : index
    %c0_2 = arith.constant 0 : index
    %c0_3 = arith.constant 0 : index
    %1 = vector.load %arg2[%c0_1, %c0_2, %c0_3] : memref<4x8x32xbf16, #tpu.memory_space<vmem>>, vector<4x8x32xbf16>
    %c0_4 = arith.constant 0 : index
    %c0_5 = arith.constant 0 : index
    %2 = vector.load %arg4[%c0_4, %c0_5] : memref<32x32xbf16, #tpu.memory_space<vmem>>, vector<32x32xbf16>
    %cst = arith.constant dense<0.000000e+00> : vector<4x32xf32>
    %3 = tpu.matmul %0, %2, %cst {dimension_numbers = #tpu.dot_dimension_numbers<[1], [0], [0], [1], [0, 0, 1, 1], [], []>} : vector<4x32xbf16>, vector<32x32xbf16>, vector<4x32xf32> -> vector<4x32xf32>
    %c0_6 = arith.constant 0 : index
    %c0_7 = arith.constant 0 : index
    %4 = vector.load %arg6[%c0_6, %c0_7] : memref<1x32xf32, #tpu.memory_space<vmem>>, vector<1x32xf32>
    %5 = vector.broadcast %4 : vector<1x32xf32> to vector<4x32xf32>
    %6 = arith.addf %3, %5 : vector<4x32xf32>
    %c0_8 = arith.constant 0 : index
    %c0_9 = arith.constant 0 : index
    %7 = vector.load %arg5[%c0_8, %c0_9] : memref<32x32xbf16, #tpu.memory_space<vmem>>, vector<32x32xbf16>
    %cst_10 = arith.constant dense<0.000000e+00> : vector<4x8x32xf32>
    %8 = tpu.matmul %1, %7, %cst_10 {dimension_numbers = #tpu.dot_dimension_numbers<[2], [0], [0, 1], [1], [0, 0, 0, 1, 1, 1], [], []>} : vector<4x8x32xbf16>, vector<32x32xbf16>, vector<4x8x32xf32> -> vector<4x8x32xf32>
    %9 = vector.shape_cast %6 : vector<4x32xf32> to vector<4x1x32xf32>
    %10 = vector.broadcast %9 : vector<4x1x32xf32> to vector<4x8x32xf32>
    %11 = arith.addf %10, %8 : vector<4x8x32xf32>
    %12 = math.tanh %11 : vector<4x8x32xf32>
    %c0_11 = arith.constant 0 : index
    %c0_12 = arith.constant 0 : index
    %13 = vector.load %arg7[%c0_11, %c0_12] : memref<32x1xf32, #tpu.memory_space<vmem>>, vector<32x1xf32>
    %cst_13 = arith.constant dense<0.000000e+00> : vector<4x8x1xf32>
    %14 = tpu.matmul %12, %13, %cst_13 {dimension_numbers = #tpu.dot_dimension_numbers<[2], [0], [0, 1], [1], [0, 0, 0, 1, 1, 1], [], []>} : vector<4x8x32xf32>, vector<32x1xf32>, vector<4x8x1xf32> -> vector<4x8x1xf32>
    %cst_14 = arith.constant dense<0xFF800000> : vector<4x1xf32>
    %15 = vector.multi_reduction <maximumf>, %14, %cst_14 [1] : vector<4x8x1xf32> to vector<4x1xf32>
    %16 = vector.shape_cast %15 : vector<4x1xf32> to vector<4x1x1xf32>
    %17 = vector.broadcast %16 : vector<4x1x1xf32> to vector<4x8x1xf32>
    %18 = arith.subf %14, %17 : vector<4x8x1xf32>
    %19 = math.exp %18 : vector<4x8x1xf32>
    %cst_15 = arith.constant dense<0.000000e+00> : vector<4x1xf32>
    %20 = vector.multi_reduction <add>, %19, %cst_15 [1] : vector<4x8x1xf32> to vector<4x1xf32>
    %21 = vector.shape_cast %20 : vector<4x1xf32> to vector<4x1x1xf32>
    %22 = tpu.reciprocal %21 {approx = true} : vector<4x1x1xf32> -> vector<4x1x1xf32>
    %23 = vector.broadcast %22 : vector<4x1x1xf32> to vector<4x8x1xf32>
    %24 = arith.mulf %19, %23 : vector<4x8x1xf32>
    %25 = arith.extf %1 : vector<4x8x32xbf16> to vector<4x8x32xf32>
    %26 = vector.broadcast %24 : vector<4x8x1xf32> to vector<4x8x32xf32>
    %27 = arith.mulf %26, %25 : vector<4x8x32xf32>
    %cst_16 = arith.constant dense<0.000000e+00> : vector<4x32xf32>
    %28 = vector.multi_reduction <add>, %27, %cst_16 [1] : vector<4x8x32xf32> to vector<4x32xf32>
    %c0_17 = arith.constant 0 : index
    %c0_18 = arith.constant 0 : index
    %c0_19 = arith.constant 0 : index
    %29 = vector.load %arg3[%c0_17, %c0_18, %c0_19] : memref<4x8x32xbf16, #tpu.memory_space<vmem>>, vector<4x8x32xbf16>
    %c0_20 = arith.constant 0 : index
    %c0_21 = arith.constant 0 : index
    %30 = vector.load %arg8[%c0_20, %c0_21] : memref<32x32xbf16, #tpu.memory_space<vmem>>, vector<32x32xbf16>
    %cst_22 = arith.constant dense<0.000000e+00> : vector<4x32xf32>
    %31 = tpu.matmul %0, %30, %cst_22 {dimension_numbers = #tpu.dot_dimension_numbers<[1], [0], [0], [1], [0, 0, 1, 1], [], []>} : vector<4x32xbf16>, vector<32x32xbf16>, vector<4x32xf32> -> vector<4x32xf32>
    %c0_23 = arith.constant 0 : index
    %c0_24 = arith.constant 0 : index
    %32 = vector.load %arg10[%c0_23, %c0_24] : memref<1x32xf32, #tpu.memory_space<vmem>>, vector<1x32xf32>
    %33 = vector.broadcast %32 : vector<1x32xf32> to vector<4x32xf32>
    %34 = arith.addf %31, %33 : vector<4x32xf32>
    %c0_25 = arith.constant 0 : index
    %c0_26 = arith.constant 0 : index
    %35 = vector.load %arg9[%c0_25, %c0_26] : memref<32x32xbf16, #tpu.memory_space<vmem>>, vector<32x32xbf16>
    %cst_27 = arith.constant dense<0.000000e+00> : vector<4x8x32xf32>
    %36 = tpu.matmul %29, %35, %cst_27 {dimension_numbers = #tpu.dot_dimension_numbers<[2], [0], [0, 1], [1], [0, 0, 0, 1, 1, 1], [], []>} : vector<4x8x32xbf16>, vector<32x32xbf16>, vector<4x8x32xf32> -> vector<4x8x32xf32>
    %37 = vector.shape_cast %34 : vector<4x32xf32> to vector<4x1x32xf32>
    %38 = vector.broadcast %37 : vector<4x1x32xf32> to vector<4x8x32xf32>
    %39 = arith.addf %38, %36 : vector<4x8x32xf32>
    %40 = math.tanh %39 : vector<4x8x32xf32>
    %c0_28 = arith.constant 0 : index
    %c0_29 = arith.constant 0 : index
    %41 = vector.load %arg11[%c0_28, %c0_29] : memref<32x1xf32, #tpu.memory_space<vmem>>, vector<32x1xf32>
    %cst_30 = arith.constant dense<0.000000e+00> : vector<4x8x1xf32>
    %42 = tpu.matmul %40, %41, %cst_30 {dimension_numbers = #tpu.dot_dimension_numbers<[2], [0], [0, 1], [1], [0, 0, 0, 1, 1, 1], [], []>} : vector<4x8x32xf32>, vector<32x1xf32>, vector<4x8x1xf32> -> vector<4x8x1xf32>
    %cst_31 = arith.constant dense<0xFF800000> : vector<4x1xf32>
    %43 = vector.multi_reduction <maximumf>, %42, %cst_31 [1] : vector<4x8x1xf32> to vector<4x1xf32>
    %44 = vector.shape_cast %43 : vector<4x1xf32> to vector<4x1x1xf32>
    %45 = vector.broadcast %44 : vector<4x1x1xf32> to vector<4x8x1xf32>
    %46 = arith.subf %42, %45 : vector<4x8x1xf32>
    %47 = math.exp %46 : vector<4x8x1xf32>
    %cst_32 = arith.constant dense<0.000000e+00> : vector<4x1xf32>
    %48 = vector.multi_reduction <add>, %47, %cst_32 [1] : vector<4x8x1xf32> to vector<4x1xf32>
    %49 = vector.shape_cast %48 : vector<4x1xf32> to vector<4x1x1xf32>
    %50 = tpu.reciprocal %49 {approx = true} : vector<4x1x1xf32> -> vector<4x1x1xf32>
    %51 = vector.broadcast %50 : vector<4x1x1xf32> to vector<4x8x1xf32>
    %52 = arith.mulf %47, %51 : vector<4x8x1xf32>
    %53 = arith.extf %29 : vector<4x8x32xbf16> to vector<4x8x32xf32>
    %54 = vector.broadcast %52 : vector<4x8x1xf32> to vector<4x8x32xf32>
    %55 = arith.mulf %54, %53 : vector<4x8x32xf32>
    %cst_33 = arith.constant dense<0.000000e+00> : vector<4x32xf32>
    %56 = vector.multi_reduction <add>, %55, %cst_33 [1] : vector<4x8x32xf32> to vector<4x32xf32>
    %57 = arith.addf %28, %56 : vector<4x32xf32>
    %58 = arith.extf %0 : vector<4x32xbf16> to vector<4x32xf32>
    %59 = arith.addf %57, %58 : vector<4x32xf32>
    %c0_34 = arith.constant 0 : index
    %c0_35 = arith.constant 0 : index
    %60 = vector.load %arg12[%c0_34, %c0_35] : memref<32x128xf32, #tpu.memory_space<vmem>>, vector<32x128xf32>
    %cst_36 = arith.constant dense<0.000000e+00> : vector<4x128xf32>
    %61 = tpu.matmul %59, %60, %cst_36 {dimension_numbers = #tpu.dot_dimension_numbers<[1], [0], [0], [1], [0, 0, 1, 1], [], []>} : vector<4x32xf32>, vector<32x128xf32>, vector<4x128xf32> -> vector<4x128xf32>
    %c0_37 = arith.constant 0 : index
    %c0_38 = arith.constant 0 : index
    %62 = vector.load %arg13[%c0_37, %c0_38] : memref<1x128xf32, #tpu.memory_space<vmem>>, vector<1x128xf32>
    %63 = vector.broadcast %62 : vector<1x128xf32> to vector<4x128xf32>
    %64 = arith.addf %61, %63 : vector<4x128xf32>
    %c0_39 = arith.constant 0 : index
    %c0_40 = arith.constant 0 : index
    %65 = vector.load %arg14[%c0_39, %c0_40] : memref<4x128xf32, #tpu.memory_space<vmem>>, vector<4x128xf32>
    tpu.vector_store %arg14[%c0_39, %c0_40], %64 {strides = array<i32>} : memref<4x128xf32, #tpu.memory_space<vmem>>, vector<4x128xf32>,
    return
  }
  func.func @transform_0(%arg0: i32) -> (i32, i32) {
    %c0_i32 = arith.constant 0 : i32
    %c0_i32_0 = arith.constant 0 : i32
    return %arg0, %c0_i32 : i32, i32
  }
  func.func @transform_1(%arg0: i32) -> (i32, i32, i32) {
    %c0_i32 = arith.constant 0 : i32
    %c0_i32_0 = arith.constant 0 : i32
    %c0_i32_1 = arith.constant 0 : i32
    return %arg0, %c0_i32, %c0_i32_0 : i32, i32, i32
  }
  func.func @transform_2(%arg0: i32) -> (i32, i32, i32) {
    %c0_i32 = arith.constant 0 : i32
    %c0_i32_0 = arith.constant 0 : i32
    %c0_i32_1 = arith.constant 0 : i32
    return %arg0, %c0_i32, %c0_i32_0 : i32, i32, i32
  }
  func.func @transform_3(%arg0: i32) -> (i32, i32) {
    %c0_i32 = arith.constant 0 : i32
    %c0_i32_0 = arith.constant 0 : i32
    %c0_i32_1 = arith.constant 0 : i32
    return %c0_i32, %c0_i32_0 : i32, i32
  }
  func.func @transform_4(%arg0: i32) -> (i32, i32) {
    %c0_i32 = arith.constant 0 : i32
    %c0_i32_0 = arith.constant 0 : i32
    %c0_i32_1 = arith.constant 0 : i32
    return %c0_i32, %c0_i32_0 : i32, i32
  }
  func.func @transform_5(%arg0: i32) -> (i32, i32) {
    %c0_i32 = arith.constant 0 : i32
    %c0_i32_0 = arith.constant 0 : i32
    %c0_i32_1 = arith.constant 0 : i32
    return %c0_i32, %c0_i32_0 : i32, i32
  }
  func.func @transform_6(%arg0: i32) -> (i32, i32) {
    %c0_i32 = arith.constant 0 : i32
    %c0_i32_0 = arith.constant 0 : i32
    %c0_i32_1 = arith.constant 0 : i32
    return %c0_i32, %c0_i32_0 : i32, i32
  }
  func.func @transform_7(%arg0: i32) -> (i32, i32) {
    %c0_i32 = arith.constant 0 : i32
    %c0_i32_0 = arith.constant 0 : i32
    %c0_i32_1 = arith.constant 0 : i32
    return %c0_i32, %c0_i32_0 : i32, i32
  }
  func.func @transform_8(%arg0: i32) -> (i32, i32) {
    %c0_i32 = arith.constant 0 : i32
    %c0_i32_0 = arith.constant 0 : i32
    %c0_i32_1 = arith.constant 0 : i32
    return %c0_i32, %c0_i32_0 : i32, i32
  }
  func.func @transform_9(%arg0: i32) -> (i32, i32) {
    %c0_i32 = arith.constant 0 : i32
    %c0_i32_0 = arith.constant 0 : i32
    %c0_i32_1 = arith.constant 0 : i32
    return %c0_i32, %c0_i32_0 : i32, i32
  }
  func.func @transform_10(%arg0: i32) -> (i32, i32) {
    %c0_i32 = arith.constant 0 : i32
    %c0_i32_0 = arith.constant 0 : i32
    %c0_i32_1 = arith.constant 0 : i32
    return %c0_i32, %c0_i32_0 : i32, i32
  }
  func.func @transform_11(%arg0: i32) -> (i32, i32) {
    %c0_i32 = arith.constant 0 : i32
    %c0_i32_0 = arith.constant 0 : i32
    %c0_i32_1 = arith.constant 0 : i32
    return %c0_i32, %c0_i32_0 : i32, i32
  }
  func.func @transform_12(%arg0: i32) -> (i32, i32) {
    %c0_i32 = arith.constant 0 : i32
    %c0_i32_0 = arith.constant 0 : i32
    %c0_i32_1 = arith.constant 0 : i32
    return %c0_i32, %c0_i32_0 : i32, i32
  }
  func.func @transform_13(%arg0: i32) -> (i32, i32) {
    %c0_i32 = arith.constant 0 : i32
    %c0_i32_0 = arith.constant 0 : i32
    return %arg0, %c0_i32 : i32, i32
  }
}

</mosaic_0001>

<llo_original>
// kernel: simple_classifier.1
$region0: #{simple_classifier.1}
  #allocation0 [shape = 'u32[]', space=smem, size = 0x4, offset = 0x4, fixed_abs, tag = 'smem constant byte address 0x4 - core index']
  #allocation1 [shape = 'u32[144,128]{1,0:T(1,128)}', space=vmem, size = 0x12000, scoped, tag = 'internal scratch']
  %s0 = inlined_call_operand.vmem [shape: bf16[4,32], index: 0, kind: input, shape index: {}]
  %s1 = inlined_call_operand.vmem [shape: bf16[4,8,32], index: 1, kind: input, shape index: {}]
  %s2 = inlined_call_operand.vmem [shape: bf16[4,8,32], index: 2, kind: input, shape index: {}]
  %s3 = inlined_call_operand.vmem [shape: bf16[32,32], index: 3, kind: input, shape index: {}]
  %s4 = inlined_call_operand.vmem [shape: bf16[32,32], index: 4, kind: input, shape index: {}]
  %s5 = inlined_call_operand.vmem [shape: f32[1,32], index: 5, kind: input, shape index: {}]
  %s6 = inlined_call_operand.vmem [shape: f32[32,1], index: 6, kind: input, shape index: {}]
  %s7 = inlined_call_operand.vmem [shape: bf16[32,32], index: 7, kind: input, shape index: {}]
  %s8 = inlined_call_operand.vmem [shape: bf16[32,32], index: 8, kind: input, shape index: {}]
  %s9 = inlined_call_operand.vmem [shape: f32[1,32], index: 9, kind: input, shape index: {}]
  %s10 = inlined_call_operand.vmem [shape: f32[32,1], index: 10, kind: input, shape index: {}]
  %s11 = inlined_call_operand.vmem [shape: f32[32,128], index: 11, kind: input, shape index: {}]
  %s12 = inlined_call_operand.vmem [shape: f32[1,128], index: 12, kind: input, shape index: {}]
  %s13 = inlined_call_operand.vmem [shape: f32[4,128], index: 13, kind: output, shape index: {}]
  %s14 = sld [smem:[#allocation0]]
  $region62: #{simple_classifier.1} parent=0
    _
  %s16 = ssub.s32 1, %s14
  %s17 = scalar_select 0, %s16, %s14
  // Predicated region
  $region2: #{simple_classifier.1} parent=0 // pred_check
    _
  $region3: #{simple_classifier.1} parent=0 // pred_check_branch
    %19 = sbr.rel (0) target = $region5
  $region4: #{simple_classifier.1} parent=0 // pred_region
    _
  $region5: #{simple_classifier.1} parent=0 // pred_fallthru
    _
  // Predicated region
  $region6: #{simple_classifier.1} parent=0 // pred_check
    _
  $region7: #{simple_classifier.1} parent=0 // pred_check_branch
    %21 = sbr.rel (0) target = $region9
  $region8: #{simple_classifier.1} parent=0 // pred_region
    _
  $region9: #{simple_classifier.1} parent=0 // pred_fallthru
    _
  // Predicated region
  $region10: #{simple_classifier.1} parent=0 // pred_check
    _
  $region11: #{simple_classifier.1} parent=0 // pred_check_branch
    %23 = sbr.rel (0) target = $region13
  $region12: #{simple_classifier.1} parent=0 // pred_region
    _
  $region13: #{simple_classifier.1} parent=0 // pred_fallthru
    _
  // Predicated region
  $region14: #{simple_classifier.1} parent=0 // pred_check
    _
  $region15: #{simple_classifier.1} parent=0 // pred_check_branch
    %25 = sbr.rel (0) target = $region17
  $region16: #{simple_classifier.1} parent=0 // pred_region
    _
  $region17: #{simple_classifier.1} parent=0 // pred_fallthru
    _
  // Predicated region
  $region18: #{simple_classifier.1} parent=0 // pred_check
    _
  $region19: #{simple_classifier.1} parent=0 // pred_check_branch
    %27 = sbr.rel (0) target = $region21
  $region20: #{simple_classifier.1} parent=0 // pred_region
    _
  $region21: #{simple_classifier.1} parent=0 // pred_fallthru
    _
  // Predicated region
  $region22: #{simple_classifier.1} parent=0 // pred_check
    _
  $region23: #{simple_classifier.1} parent=0 // pred_check_branch
    %29 = sbr.rel (0) target = $region25
  $region24: #{simple_classifier.1} parent=0 // pred_region
    _
  $region25: #{simple_classifier.1} parent=0 // pred_fallthru
    _
  // Predicated region
  $region26: #{simple_classifier.1} parent=0 // pred_check
    _
  $region27: #{simple_classifier.1} parent=0 // pred_check_branch
    %31 = sbr.rel (0) target = $region29
  $region28: #{simple_classifier.1} parent=0 // pred_region
    _
  $region29: #{simple_classifier.1} parent=0 // pred_fallthru
    _
  // Predicated region
  $region30: #{simple_classifier.1} parent=0 // pred_check
    _
  $region31: #{simple_classifier.1} parent=0 // pred_check_branch
    %33 = sbr.rel (0) target = $region33
  $region32: #{simple_classifier.1} parent=0 // pred_region
    _
  $region33: #{simple_classifier.1} parent=0 // pred_fallthru
    _
  // Predicated region
  $region34: #{simple_classifier.1} parent=0 // pred_check
    _
  $region35: #{simple_classifier.1} parent=0 // pred_check_branch
    %35 = sbr.rel (0) target = $region37
  $region36: #{simple_classifier.1} parent=0 // pred_region
    _
  $region37: #{simple_classifier.1} parent=0 // pred_fallthru
    _
  // Predicated region
  $region38: #{simple_classifier.1} parent=0 // pred_check
    _
  $region39: #{simple_classifier.1} parent=0 // pred_check_branch
    %37 = sbr.rel (0) target = $region41
  $region40: #{simple_classifier.1} parent=0 // pred_region
    _
  $region41: #{simple_classifier.1} parent=0 // pred_fallthru
    _
  // Predicated region
  $region42: #{simple_classifier.1} parent=0 // pred_check
    _
  $region43: #{simple_classifier.1} parent=0 // pred_check_branch
    %39 = sbr.rel (0) target = $region45
  $region44: #{simple_classifier.1} parent=0 // pred_region
    _
  $region45: #{simple_classifier.1} parent=0 // pred_fallthru
    _
  // Predicated region
  $region46: #{simple_classifier.1} parent=0 // pred_check
    _
  $region47: #{simple_classifier.1} parent=0 // pred_check_branch
    %41 = sbr.rel (0) target = $region49
  $region48: #{simple_classifier.1} parent=0 // pred_region
    _
  $region49: #{simple_classifier.1} parent=0 // pred_fallthru
    _
  // Predicated region
  $region50: #{simple_classifier.1} parent=0 // pred_check
    _
  $region51: #{simple_classifier.1} parent=0 // pred_check_branch
    %43 = sbr.rel (0) target = $region53
  $region52: #{simple_classifier.1} parent=0 // pred_region
    _
  $region53: #{simple_classifier.1} parent=0 // pred_fallthru
    _
  %v45 = vld [vmem:[%s0] sm:$0x3]
  %v46 = vld [vmem:[%s1] sm:$0xf]
  %v47 = vld [vmem:[%s1 + $0x4] sm:$0xf]
  %v48 = vld [vmem:[%s1 + $0x8] sm:$0xf]
  %v49 = vld [vmem:[%s1 + $0xc] sm:$0xf]
  %v50 = vld [vmem:[%s3] sm:$0xf]
  %v51 = vld [vmem:[%s3 + $0x4] sm:$0xf]
  %v52 = vld [vmem:[%s3 + $0x8] sm:$0xf]
  %v53 = vld [vmem:[%s3 + $0xc] sm:$0xf]
  %v54 = vld [vmem:[%s5] sm:$0x1]
  %v56 = vlaneseq
  %v57 = vshrl.u32 %v56, 7
  %v58 = vsub.s32 0, %v57
  %v59 = vrot.slane %v54, %v58
  %v65 = vunpack.c.l.b16 %v50
  %v66 = vunpack.c.l.b16 %v51
  %v67 = vunpack.c.l.b16 %v52
  %v68 = vunpack.c.l.b16 %v53
  %v69 = vpack.c.b16 %v66, %v65
  %v70 = vpack.c.b16 %v68, %v67
  %vm73 = vcmask 261120
  %v75 = vsel %vm73, %v45, 0
  %77 = vmatprep.subr.bf16.mxu0 0
  %78 = vmatpush1.bf16.msra.mxu0 0
  %79 = vmatprep.subr.bf16.mxu0 0
  %80 = vmatpush1.bf16.msra.mxu0 0
  %81 = vmatprep.subr.bf16.mxu0 0
  %82 = vmatpush1.bf16.msra.mxu0 0
  %83 = vmatprep.subr.bf16.mxu0 0
  %84 = vmatpush1.bf16.msra.mxu0 0
  %85 = vmatprep.subr.bf16.mxu0 0
  %86 = vmatpush1.bf16.msra.mxu0 0
  %87 = vmatprep.subr.bf16.mxu0 0
  %88 = vmatpush1.bf16.msra.mxu0 0
  %89 = vmatprep.subr.bf16.mxu0 0
  %90 = vmatpush1.bf16.msra.mxu0 %v70
  %91 = vmatprep.subr.bf16.mxu0 0
  %92 = vmatpush1.bf16.msra.mxu0 %v69
  %93 = vmatprep.subr.bf16.mxu0 0
  %94 = vmatpush2.bf16.msra.mxu0 0
  %95 = vmatprep.subr.bf16.mxu0 0
  %96 = vmatpush2.bf16.msra.mxu0 0
  %97 = vmatprep.subr.bf16.mxu0 0
  %98 = vmatpush2.bf16.msra.mxu0 0
  %99 = vmatprep.subr.bf16.mxu0 0
  %100 = vmatpush2.bf16.msra.mxu0 0
  %101 = vmatprep.subr.bf16.mxu0 0
  %102 = vmatpush2.bf16.msra.mxu0 0
  %103 = vmatprep.subr.bf16.mxu0 0
  %104 = vmatpush2.bf16.msra.mxu0 0
  %105 = vmatprep.subr.bf16.mxu0 0
  %106 = vmatpush2.bf16.msra.mxu0 0
  %107 = vmatprep.subr.bf16.mxu0 0
  %108 = vmatpush2.bf16.msra.mxu0 0
  %109 = vmatprep.mubr.bf16.mxu0 0
  %110 = vmatmul.mubr.bf16.gmra.mxu0 %v75
  %v111 = vpop.f32.mrf.mxu0
  %v112 = vadd.f32 %v59, %v111
  %v113 = vpop.f32.mrf.mxu0
  %v114 = vpop.f32.mrf.mxu0
  %v115 = vpop.f32.mrf.mxu0
  %116 = vdwg.mxu0
  %v117 = vld [vmem:[%s4] sm:$0xf]
  %v118 = vld [vmem:[%s4 + $0x4] sm:$0xf]
  %v119 = vld [vmem:[%s4 + $0x8] sm:$0xf]
  %v120 = vld [vmem:[%s4 + $0xc] sm:$0xf]
  %v125 = vunpack.c.l.b16 %v46
  %v126 = vunpack.c.l.b16 %v47
  %v127 = vunpack.c.l.b16 %v48
  %v128 = vunpack.c.l.b16 %v49
  %v129 = vpack.c.b16 %v126, %v125
  %v130 = vpack.c.b16 %v128, %v127
  %v135 = vunpack.c.l.b16 %v117
  %v136 = vunpack.c.l.b16 %v118
  %v137 = vunpack.c.l.b16 %v119
  %v138 = vunpack.c.l.b16 %v120
  %v139 = vpack.c.b16 %v136, %v135
  %v140 = vpack.c.b16 %v138, %v137
  %v144 = vsel %vm73, %v129, 0
  %v147 = vsel %vm73, %v130, 0
  %149 = vmatprep.subr.bf16.mxu0 0
  %150 = vmatpush1.bf16.msra.mxu0 0
  %151 = vmatprep.subr.bf16.mxu0 0
  %152 = vmatpush1.bf16.msra.mxu0 0
  %153 = vmatprep.subr.bf16.mxu0 0
  %154 = vmatpush1.bf16.msra.mxu0 0
  %155 = vmatprep.subr.bf16.mxu0 0
  %156 = vmatpush1.bf16.msra.mxu0 0
  %157 = vmatprep.subr.bf16.mxu0 0
  %158 = vmatpush1.bf16.msra.mxu0 0
  %159 = vmatprep.subr.bf16.mxu0 0
  %160 = vmatpush1.bf16.msra.mxu0 0
  %161 = vmatprep.subr.bf16.mxu0 0
  %162 = vmatpush1.bf16.msra.mxu0 %v140
  %163 = vmatprep.subr.bf16.mxu0 0
  %164 = vmatpush1.bf16.msra.mxu0 %v139
  %165 = vmatprep.subr.bf16.mxu0 0
  %166 = vmatpush2.bf16.msra.mxu0 0
  %167 = vmatprep.subr.bf16.mxu0 0
  %168 = vmatpush2.bf16.msra.mxu0 0
  %169 = vmatprep.subr.bf16.mxu0 0
  %170 = vmatpush2.bf16.msra.mxu0 0
  %171 = vmatprep.subr.bf16.mxu0 0
  %172 = vmatpush2.bf16.msra.mxu0 0
  %173 = vmatprep.subr.bf16.mxu0 0
  %174 = vmatpush2.bf16.msra.mxu0 0
  %175 = vmatprep.subr.bf16.mxu0 0
  %176 = vmatpush2.bf16.msra.mxu0 0
  %177 = vmatprep.subr.bf16.mxu0 0
  %178 = vmatpush2.bf16.msra.mxu0 0
  %179 = vmatprep.subr.bf16.mxu0 0
  %180 = vmatpush2.bf16.msra.mxu0 0
  %181 = vmatprep.mubr.bf16.mxu0 0
  %182 = vmatmul.mubr.bf16.gmra.mxu0 %v144
  %v183 = vpop.f32.mrf.mxu0
  %v184 = vadd.f32 0.0, %v183
  %v185 = vpop.f32.mrf.mxu0
  %v186 = vpop.f32.mrf.mxu0
  %v187 = vadd.f32 0.0, %v186
  %v188 = vpop.f32.mrf.mxu0
  %189 = vmatprep.mubr.bf16.mxu0 0
  %190 = vmatmul.mubr.bf16.gmra.mxu0 %v147
  %v191 = vpop.f32.mrf.mxu0
  %v192 = vadd.f32 0.0, %v191
  %v193 = vpop.f32.mrf.mxu0
  %v194 = vpop.f32.mrf.mxu0
  %v195 = vadd.f32 0.0, %v194
  %v196 = vpop.f32.mrf.mxu0
  %197 = vdwg.mxu0
  %v200 = vunpack.c.l.s4 1966171168
  %v201 = vunpack.c.0.s8 %v200
  %v202 = vlaneseq
  %v203 = vshrl.u32 %v202, 7
  %v204 = vsub.s32 %v201, %v203
  %v205 = vrot.slane %v112, %v204
  %v206 = vcombine.high %v205, %v205
  %v208 = vunpack.c.l.s4 1966171168
  %v209 = vunpack.c.0.s8 %v208
  %v210 = vlaneseq
  %v211 = vshrl.u32 %v210, 7
  %v212 = vsub.s32 %v209, %v211
  %v213 = vrot.slane %v205, %v212
  %v215 = vunpack.c.l.s4 1966171168
  %v216 = vunpack.c.0.s8 %v215
  %v217 = vlaneseq
  %v218 = vshrl.u32 %v217, 7
  %v219 = vsub.s32 %v216, %v218
  %v220 = vrot.slane %v206, %v219
  %v221 = vcombine.high %v213, %v213
  %v222 = vcombine.high %v220, %v220
  %v223 = vlaneseq
  %v224 = vshrl.u32 %v223, 7
  %v225 = vsub.s32 0, %v224
  %v226 = vrot.slane %v213, %v225
  %v227 = vlaneseq
  %v228 = vshrl.u32 %v227, 7
  %v229 = vsub.s32 0, %v228
  %v230 = vrot.slane %v220, %v229
  %v231 = vlaneseq
  %v232 = vshrl.u32 %v231, 7
  %v233 = vsub.s32 0, %v232
  %v234 = vrot.slane %v221, %v233
  %v235 = vlaneseq
  %v236 = vshrl.u32 %v235, 7
  %v237 = vsub.s32 0, %v236
  %v238 = vrot.slane %v222, %v237
  %v243 = vadd.f32 %v226, %v184
  %v244 = vadd.f32 %v230, %v187
  %v245 = vadd.f32 %v234, %v192
  %v246 = vadd.f32 %v238, %v195
  %v247 = vtanh.pop %v243
  %v248 = vtanh.pop %v244
  %v249 = vtanh.pop %v245
  %v250 = vtanh.pop %v246
  %v251 = vld [vmem:[%s6] sm:$0xff]
  %v252 = vld [vmem:[%s6 + $0x8] sm:$0xff]
  %v253 = vld [vmem:[%s6 + $0x10] sm:$0xff]
  %v254 = vld [vmem:[%s6 + $0x18] sm:$0xff]
  %v256 = vsel %vm73, %v247, 0
  %v259 = vsel %vm73, %v248, 0
  %v262 = vsel %vm73, %v249, 0
  %v265 = vsel %vm73, %v250, 0
  %267 = vmatprep.subr.mxu0 0.0
  %268 = vmatpush1.msra.mxu0 0.0
  %269 = vmatprep.subr.mxu0 0.0
  %270 = vmatpush1.msra.mxu0 0.0
  %271 = vmatprep.subr.mxu0 0.0
  %272 = vmatpush1.msra.mxu0 0.0
  %273 = vmatprep.subr.mxu0 0.0
  %274 = vmatpush1.msra.mxu0 0.0
  %275 = vmatprep.subr.mxu0 0.0
  %276 = vmatpush1.msra.mxu0 0.0
  %277 = vmatprep.subr.mxu0 0.0
  %278 = vmatpush1.msra.mxu0 0.0
  %279 = vmatprep.subr.mxu0 0.0
  %280 = vmatpush1.msra.mxu0 0.0
  %281 = vmatprep.subr.mxu0 0.0
  %282 = vmatpush1.msra.mxu0 0.0
  %283 = vmatprep.subr.mxu0 0.0
  %284 = vmatpush1.msra.mxu0 0.0
  %285 = vmatprep.subr.mxu0 0.0
  %286 = vmatpush1.msra.mxu0 0.0
  %287 = vmatprep.subr.mxu0 0.0
  %288 = vmatpush1.msra.mxu0 0.0
  %289 = vmatprep.subr.mxu0 0.0
  %290 = vmatpush1.msra.mxu0 0.0
  %291 = vmatprep.subr.mxu0 0.0
  %292 = vmatpush1.msra.mxu0 %v254
  %293 = vmatprep.subr.mxu0 0.0
  %294 = vmatpush1.msra.mxu0 %v253
  %295 = vmatprep.subr.mxu0 0.0
  %296 = vmatpush1.msra.mxu0 %v252
  %297 = vmatprep.subr.mxu0 0.0
  %298 = vmatpush1.msra.mxu0 %v251
  %299 = vmatprep.subr.mxu0 0.0
  %300 = vmatpush2.msra.mxu0 0.0
  %301 = vmatprep.subr.mxu0 0.0
  %302 = vmatpush2.msra.mxu0 0.0
  %303 = vmatprep.subr.mxu0 0.0
  %304 = vmatpush2.msra.mxu0 0.0
  %305 = vmatprep.subr.mxu0 0.0
  %306 = vmatpush2.msra.mxu0 0.0
  %307 = vmatprep.subr.mxu0 0.0
  %308 = vmatpush2.msra.mxu0 0.0
  %309 = vmatprep.subr.mxu0 0.0
  %310 = vmatpush2.msra.mxu0 0.0
  %311 = vmatprep.subr.mxu0 0.0
  %312 = vmatpush2.msra.mxu0 0.0
  %313 = vmatprep.subr.mxu0 0.0
  %314 = vmatpush2.msra.mxu0 0.0
  %315 = vmatprep.subr.mxu0 0.0
  %316 = vmatpush2.msra.mxu0 0.0
  %317 = vmatprep.subr.mxu0 0.0
  %318 = vmatpush2.msra.mxu0 0.0
  %319 = vmatprep.subr.mxu0 0.0
  %320 = vmatpush2.msra.mxu0 0.0
  %321 = vmatprep.subr.mxu0 0.0
  %322 = vmatpush2.msra.mxu0 0.0
  %323 = vmatprep.subr.mxu0 0.0
  %324 = vmatpush2.msra.mxu0 0.0
  %325 = vmatprep.subr.mxu0 0.0
  %326 = vmatpush2.msra.mxu0 0.0
  %327 = vmatprep.subr.mxu0 0.0
  %328 = vmatpush2.msra.mxu0 0.0
  %329 = vmatprep.subr.mxu0 0.0
  %330 = vmatpush2.msra.mxu0 0.0
  %331 = vmatprep.mubr.f32.mxu0 0.0
  %332 = vmatmul.mubr.f32.gmra.mxu0 %v256
  %v333 = vpop.f32.mrf.mxu0
  %v334 = vadd.f32 0.0, %v333
  %v335 = vpop.f32.mrf.mxu0
  %336 = vmatprep.mubr.f32.mxu0 0.0
  %337 = vmatmul.mubr.f32.gmra.mxu0 %v259
  %v338 = vpop.f32.mrf.mxu0
  %v339 = vadd.f32 0.0, %v338
  %v340 = vpop.f32.mrf.mxu0
  %341 = vmatprep.mubr.f32.mxu0 0.0
  %342 = vmatmul.mubr.f32.gmra.mxu0 %v262
  %v343 = vpop.f32.mrf.mxu0
  %v344 = vadd.f32 0.0, %v343
  %v345 = vpop.f32.mrf.mxu0
  %346 = vmatprep.mubr.f32.mxu0 0.0
  %347 = vmatmul.mubr.f32.gmra.mxu0 %v265
  %v348 = vpop.f32.mrf.mxu0
  %v349 = vadd.f32 0.0, %v348
  %v350 = vpop.f32.mrf.mxu0
  %351 = vdwg.mxu0
  %vm352 = vcmask 7168
  %v353 = vsel %vm352, %v334, -inf
  %v354 = vrot.slane %v353, 4
  %v355 = vmax.f32 %v353, %v354
  %v356 = vrot.slane %v355, 2
  %v357 = vmax.f32 %v355, %v356
  %v358 = vrot.slane %v357, 1
  %v359 = vmax.f32 %v357, %v358
  %v360 = vsel %vm352, %v339, -inf
  %v361 = vrot.slane %v360, 4
  %v362 = vmax.f32 %v360, %v361
  %v363 = vrot.slane %v362, 2
  %v364 = vmax.f32 %v362, %v363
  %v365 = vrot.slane %v364, 1
  %v366 = vmax.f32 %v364, %v365
  %v367 = vsel %vm352, %v344, -inf
  %v368 = vrot.slane %v367, 4
  %v369 = vmax.f32 %v367, %v368
  %v370 = vrot.slane %v369, 2
  %v371 = vmax.f32 %v369, %v370
  %v372 = vrot.slane %v371, 1
  %v373 = vmax.f32 %v371, %v372
  %v374 = vsel %vm352, %v349, -inf
  %v375 = vrot.slane %v374, 4
  %v376 = vmax.f32 %v374, %v375
  %v377 = vrot.slane %v376, 2
  %v378 = vmax.f32 %v376, %v377
  %v379 = vrot.slane %v378, 1
  %v380 = vmax.f32 %v378, %v379
  %v381 = vsub.f32 %v334, %v359
  %v382 = vsub.f32 %v339, %v366
  %v383 = vsub.f32 %v344, %v373
  %v384 = vsub.f32 %v349, %v380
  %v385 = vmul.f32 %v381, 1.442695
  %v386 = vpow.pop %v385
  %v387 = vmul.f32 %v382, 1.442695
  %v388 = vpow.pop %v387
  %v389 = vmul.f32 %v383, 1.442695
  %v390 = vpow.pop %v389
  %v391 = vmul.f32 %v384, 1.442695
  %v392 = vpow.pop %v391
  %v393 = vsel %vm352, %v386, 0.0
  %v394 = vrot.slane %v393, 4
  %v395 = vadd.f32 %v393, %v394
  %v396 = vrot.slane %v395, 2
  %v397 = vadd.f32 %v395, %v396
  %v398 = vrot.slane %v397, 1
  %v399 = vadd.f32 %v397, %v398
  %v400 = vsel %vm352, %v388, 0.0
  %v401 = vrot.slane %v400, 4
  %v402 = vadd.f32 %v400, %v401
  %v403 = vrot.slane %v402, 2
  %v404 = vadd.f32 %v402, %v403
  %v405 = vrot.slane %v404, 1
  %v406 = vadd.f32 %v404, %v405
  %v407 = vsel %vm352, %v390, 0.0
  %v408 = vrot.slane %v407, 4
  %v409 = vadd.f32 %v407, %v408
  %v410 = vrot.slane %v409, 2
  %v411 = vadd.f32 %v409, %v410
  %v412 = vrot.slane %v411, 1
  %v413 = vadd.f32 %v411, %v412
  %v414 = vsel %vm352, %v392, 0.0
  %v415 = vrot.slane %v414, 4
  %v416 = vadd.f32 %v414, %v415
  %v417 = vrot.slane %v416, 2
  %v418 = vadd.f32 %v416, %v417
  %v419 = vrot.slane %v418, 1
  %v420 = vadd.f32 %v418, %v419
  %v421 = vrcp.pop %v399
  %v422 = vrcp.pop %v406
  %v423 = vrcp.pop %v413
  %v424 = vrcp.pop %v420
  %v425 = vmul.f32 %v386, %v421
  %v426 = vmul.f32 %v388, %v422
  %v427 = vmul.f32 %v390, %v423
  %v428 = vmul.f32 %v392, %v424
  %v429 = vunpack.c.l.bf16 %v46
  %v430 = vunpack.c.l.bf16 %v47
  %v431 = vunpack.c.l.bf16 %v48
  %v432 = vunpack.c.l.bf16 %v49
  %434 = vset.pattern.permute.xlu0 0
  %435 = vperm.xlu0 %434, %v425
  %v436 = vpop.permute.xlu0 %435
  %439 = vset.pattern.permute.xlu0 0
  %440 = vperm.xlu0 %439, %v426
  %v441 = vpop.permute.xlu0 %440
  %444 = vset.pattern.permute.xlu0 0
  %445 = vperm.xlu0 %444, %v427
  %v446 = vpop.permute.xlu0 %445
  %449 = vset.pattern.permute.xlu0 0
  %450 = vperm.xlu0 %449, %v428
  %v451 = vpop.permute.xlu0 %450
  %v453 = vmul.f32 %v436, %v429
  %v454 = vmul.f32 %v441, %v430
  %v455 = vmul.f32 %v446, %v431
  %v456 = vmul.f32 %v451, %v432
  %v457 = vsel %vm73, %v453, 0.0
  %v458 = vrot.slane %v457, 4
  %v459 = vadd.f32 %v457, %v458
  %v460 = vrot.slane %v459, 2
  %v461 = vadd.f32 %v459, %v460
  %v462 = vrot.slane %v461, 1
  %v463 = vadd.f32 %v461, %v462
  %v464 = vsel %vm73, %v454, 0.0
  %v465 = vrot.slane %v464, 4
  %v466 = vadd.f32 %v464, %v465
  %v467 = vrot.slane %v466, 2
  %v468 = vadd.f32 %v466, %v467
  %v469 = vrot.slane %v468, 1
  %v470 = vadd.f32 %v468, %v469
  %v471 = vsel %vm73, %v455, 0.0
  %v472 = vrot.slane %v471, 4
  %v473 = vadd.f32 %v471, %v472
  %v474 = vrot.slane %v473, 2
  %v475 = vadd.f32 %v473, %v474
  %v476 = vrot.slane %v475, 1
  %v477 = vadd.f32 %v475, %v476
  %v478 = vsel %vm73, %v456, 0.0
  %v479 = vrot.slane %v478, 4
  %v480 = vadd.f32 %v478, %v479
  %v481 = vrot.slane %v480, 2
  %v482 = vadd.f32 %v480, %v481
  %v483 = vrot.slane %v482, 1
  %v484 = vadd.f32 %v482, %v483
  %v485 = vld [vmem:[%s2] sm:$0xf]
  %v486 = vld [vmem:[%s2 + $0x4] sm:$0xf]
  %v487 = vld [vmem:[%s2 + $0x8] sm:$0xf]
  %v488 = vld [vmem:[%s2 + $0xc] sm:$0xf]
  %v489 = vld [vmem:[%s7] sm:$0xf]
  %v490 = vld [vmem:[%s7 + $0x4] sm:$0xf]
  %v491 = vld [vmem:[%s7 + $0x8] sm:$0xf]
  %v492 = vld [vmem:[%s7 + $0xc] sm:$0xf]
  %v493 = vld [vmem:[%s9] sm:$0x1]
  %v495 = vlaneseq
  %v496 = vshrl.u32 %v495, 7
  %v497 = vsub.s32 0, %v496
  %v498 = vrot.slane %v493, %v497
  %v504 = vunpack.c.l.b16 %v489
  %v505 = vunpack.c.l.b16 %v490
  %v506 = vunpack.c.l.b16 %v491
  %v507 = vunpack.c.l.b16 %v492
  %v508 = vpack.c.b16 %v505, %v504
  %v509 = vpack.c.b16 %v507, %v506
  %512 = vmatprep.subr.bf16.mxu0 0
  %513 = vmatpush1.bf16.msra.mxu0 0
  %514 = vmatprep.subr.bf16.mxu0 0
  %515 = vmatpush1.bf16.msra.mxu0 0
  %516 = vmatprep.subr.bf16.mxu0 0
  %517 = vmatpush1.bf16.msra.mxu0 0
  %518 = vmatprep.subr.bf16.mxu0 0
  %519 = vmatpush1.bf16.msra.mxu0 0
  %520 = vmatprep.subr.bf16.mxu0 0
  %521 = vmatpush1.bf16.msra.mxu0 0
  %522 = vmatprep.subr.bf16.mxu0 0
  %523 = vmatpush1.bf16.msra.mxu0 0
  %524 = vmatprep.subr.bf16.mxu0 0
  %525 = vmatpush1.bf16.msra.mxu0 %v509
  %526 = vmatprep.subr.bf16.mxu0 0
  %527 = vmatpush1.bf16.msra.mxu0 %v508
  %528 = vmatprep.subr.bf16.mxu0 0
  %529 = vmatpush2.bf16.msra.mxu0 0
  %530 = vmatprep.subr.bf16.mxu0 0
  %531 = vmatpush2.bf16.msra.mxu0 0
  %532 = vmatprep.subr.bf16.mxu0 0
  %533 = vmatpush2.bf16.msra.mxu0 0
  %534 = vmatprep.subr.bf16.mxu0 0
  %535 = vmatpush2.bf16.msra.mxu0 0
  %536 = vmatprep.subr.bf16.mxu0 0
  %537 = vmatpush2.bf16.msra.mxu0 0
  %538 = vmatprep.subr.bf16.mxu0 0
  %539 = vmatpush2.bf16.msra.mxu0 0
  %540 = vmatprep.subr.bf16.mxu0 0
  %541 = vmatpush2.bf16.msra.mxu0 0
  %542 = vmatprep.subr.bf16.mxu0 0
  %543 = vmatpush2.bf16.msra.mxu0 0
  %544 = vmatprep.mubr.bf16.mxu0 0
  %545 = vmatmul.mubr.bf16.gmra.mxu0 %v75
  %v546 = vpop.f32.mrf.mxu0
  %v547 = vadd.f32 %v498, %v546
  %v548 = vpop.f32.mrf.mxu0
  %v549 = vpop.f32.mrf.mxu0
  %v550 = vpop.f32.mrf.mxu0
  %551 = vdwg.mxu0
  %v552 = vld [vmem:[%s8] sm:$0xf]
  %v553 = vld [vmem:[%s8 + $0x4] sm:$0xf]
  %v554 = vld [vmem:[%s8 + $0x8] sm:$0xf]
  %v555 = vld [vmem:[%s8 + $0xc] sm:$0xf]
  %v560 = vunpack.c.l.b16 %v485
  %v561 = vunpack.c.l.b16 %v486
  %v562 = vunpack.c.l.b16 %v487
  %v563 = vunpack.c.l.b16 %v488
  %v564 = vpack.c.b16 %v561, %v560
  %v565 = vpack.c.b16 %v563, %v562
  %v570 = vunpack.c.l.b16 %v552
  %v571 = vunpack.c.l.b16 %v553
  %v572 = vunpack.c.l.b16 %v554
  %v573 = vunpack.c.l.b16 %v555
  %v574 = vpack.c.b16 %v571, %v570
  %v575 = vpack.c.b16 %v573, %v572
  %v579 = vsel %vm73, %v564, 0
  %v582 = vsel %vm73, %v565, 0
  %584 = vmatprep.subr.bf16.mxu0 0
  %585 = vmatpush1.bf16.msra.mxu0 0
  %586 = vmatprep.subr.bf16.mxu0 0
  %587 = vmatpush1.bf16.msra.mxu0 0
  %588 = vmatprep.subr.bf16.mxu0 0
  %589 = vmatpush1.bf16.msra.mxu0 0
  %590 = vmatprep.subr.bf16.mxu0 0
  %591 = vmatpush1.bf16.msra.mxu0 0
  %592 = vmatprep.subr.bf16.mxu0 0
  %593 = vmatpush1.bf16.msra.mxu0 0
  %594 = vmatprep.subr.bf16.mxu0 0
  %595 = vmatpush1.bf16.msra.mxu0 0
  %596 = vmatprep.subr.bf16.mxu0 0
  %597 = vmatpush1.bf16.msra.mxu0 %v575
  %598 = vmatprep.subr.bf16.mxu0 0
  %599 = vmatpush1.bf16.msra.mxu0 %v574
  %600 = vmatprep.subr.bf16.mxu0 0
  %601 = vmatpush2.bf16.msra.mxu0 0
  %602 = vmatprep.subr.bf16.mxu0 0
  %603 = vmatpush2.bf16.msra.mxu0 0
  %604 = vmatprep.subr.bf16.mxu0 0
  %605 = vmatpush2.bf16.msra.mxu0 0
  %606 = vmatprep.subr.bf16.mxu0 0
  %607 = vmatpush2.bf16.msra.mxu0 0
  %608 = vmatprep.subr.bf16.mxu0 0
  %609 = vmatpush2.bf16.msra.mxu0 0
  %610 = vmatprep.subr.bf16.mxu0 0
  %611 = vmatpush2.bf16.msra.mxu0 0
  %612 = vmatprep.subr.bf16.mxu0 0
  %613 = vmatpush2.bf16.msra.mxu0 0
  %614 = vmatprep.subr.bf16.mxu0 0
  %615 = vmatpush2.bf16.msra.mxu0 0
  %616 = vmatprep.mubr.bf16.mxu0 0
  %617 = vmatmul.mubr.bf16.gmra.mxu0 %v579
  %v618 = vpop.f32.mrf.mxu0
  %v619 = vadd.f32 0.0, %v618
  %v620 = vpop.f32.mrf.mxu0
  %v621 = vpop.f32.mrf.mxu0
  %v622 = vadd.f32 0.0, %v621
  %v623 = vpop.f32.mrf.mxu0
  %624 = vmatprep.mubr.bf16.mxu0 0
  %625 = vmatmul.mubr.bf16.gmra.mxu0 %v582
  %v626 = vpop.f32.mrf.mxu0
  %v627 = vadd.f32 0.0, %v626
  %v628 = vpop.f32.mrf.mxu0
  %v629 = vpop.f32.mrf.mxu0
  %v630 = vadd.f32 0.0, %v629
  %v631 = vpop.f32.mrf.mxu0
  %632 = vdwg.mxu0
  %v635 = vunpack.c.l.s4 1966171168
  %v636 = vunpack.c.0.s8 %v635
  %v637 = vlaneseq
  %v638 = vshrl.u32 %v637, 7
  %v639 = vsub.s32 %v636, %v638
  %v640 = vrot.slane %v547, %v639
  %v641 = vcombine.high %v640, %v640
  %v643 = vunpack.c.l.s4 1966171168
  %v644 = vunpack.c.0.s8 %v643
  %v645 = vlaneseq
  %v646 = vshrl.u32 %v645, 7
  %v647 = vsub.s32 %v644, %v646
  %v648 = vrot.slane %v640, %v647
  %v650 = vunpack.c.l.s4 1966171168
  %v651 = vunpack.c.0.s8 %v650
  %v652 = vlaneseq
  %v653 = vshrl.u32 %v652, 7
  %v654 = vsub.s32 %v651, %v653
  %v655 = vrot.slane %v641, %v654
  %v656 = vcombine.high %v648, %v648
  %v657 = vcombine.high %v655, %v655
  %v658 = vlaneseq
  %v659 = vshrl.u32 %v658, 7
  %v660 = vsub.s32 0, %v659
  %v661 = vrot.slane %v648, %v660
  %v662 = vlaneseq
  %v663 = vshrl.u32 %v662, 7
  %v664 = vsub.s32 0, %v663
  %v665 = vrot.slane %v655, %v664
  %v666 = vlaneseq
  %v667 = vshrl.u32 %v666, 7
  %v668 = vsub.s32 0, %v667
  %v669 = vrot.slane %v656, %v668
  %v670 = vlaneseq
  %v671 = vshrl.u32 %v670, 7
  %v672 = vsub.s32 0, %v671
  %v673 = vrot.slane %v657, %v672
  %v678 = vadd.f32 %v661, %v619
  %v679 = vadd.f32 %v665, %v622
  %v680 = vadd.f32 %v669, %v627
  %v681 = vadd.f32 %v673, %v630
  %v682 = vtanh.pop %v678
  %v683 = vtanh.pop %v679
  %v684 = vtanh.pop %v680
  %v685 = vtanh.pop %v681
  %v686 = vld [vmem:[%s10] sm:$0xff]
  %v687 = vld [vmem:[%s10 + $0x8] sm:$0xff]
  %v688 = vld [vmem:[%s10 + $0x10] sm:$0xff]
  %v689 = vld [vmem:[%s10 + $0x18] sm:$0xff]
  %v691 = vsel %vm73, %v682, 0
  %v694 = vsel %vm73, %v683, 0
  %v697 = vsel %vm73, %v684, 0
  %v700 = vsel %vm73, %v685, 0
  %702 = vmatprep.subr.mxu0 0.0
  %703 = vmatpush1.msra.mxu0 0.0
  %704 = vmatprep.subr.mxu0 0.0
  %705 = vmatpush1.msra.mxu0 0.0
  %706 = vmatprep.subr.mxu0 0.0
  %707 = vmatpush1.msra.mxu0 0.0
  %708 = vmatprep.subr.mxu0 0.0
  %709 = vmatpush1.msra.mxu0 0.0
  %710 = vmatprep.subr.mxu0 0.0
  %711 = vmatpush1.msra.mxu0 0.0
  %712 = vmatprep.subr.mxu0 0.0
  %713 = vmatpush1.msra.mxu0 0.0
  %714 = vmatprep.subr.mxu0 0.0
  %715 = vmatpush1.msra.mxu0 0.0
  %716 = vmatprep.subr.mxu0 0.0
  %717 = vmatpush1.msra.mxu0 0.0
  %718 = vmatprep.subr.mxu0 0.0
  %719 = vmatpush1.msra.mxu0 0.0
  %720 = vmatprep.subr.mxu0 0.0
  %721 = vmatpush1.msra.mxu0 0.0
  %722 = vmatprep.subr.mxu0 0.0
  %723 = vmatpush1.msra.mxu0 0.0
  %724 = vmatprep.subr.mxu0 0.0
  %725 = vmatpush1.msra.mxu0 0.0
  %726 = vmatprep.subr.mxu0 0.0
  %727 = vmatpush1.msra.mxu0 %v689
  %728 = vmatprep.subr.mxu0 0.0
  %729 = vmatpush1.msra.mxu0 %v688
  %730 = vmatprep.subr.mxu0 0.0
  %731 = vmatpush1.msra.mxu0 %v687
  %732 = vmatprep.subr.mxu0 0.0
  %733 = vmatpush1.msra.mxu0 %v686
  %734 = vmatprep.subr.mxu0 0.0
  %735 = vmatpush2.msra.mxu0 0.0
  %736 = vmatprep.subr.mxu0 0.0
  %737 = vmatpush2.msra.mxu0 0.0
  %738 = vmatprep.subr.mxu0 0.0
  %739 = vmatpush2.msra.mxu0 0.0
  %740 = vmatprep.subr.mxu0 0.0
  %741 = vmatpush2.msra.mxu0 0.0
  %742 = vmatprep.subr.mxu0 0.0
  %743 = vmatpush2.msra.mxu0 0.0
  %744 = vmatprep.subr.mxu0 0.0
  %745 = vmatpush2.msra.mxu0 0.0
  %746 = vmatprep.subr.mxu0 0.0
  %747 = vmatpush2.msra.mxu0 0.0
  %748 = vmatprep.subr.mxu0 0.0
  %749 = vmatpush2.msra.mxu0 0.0
  %750 = vmatprep.subr.mxu0 0.0
  %751 = vmatpush2.msra.mxu0 0.0
  %752 = vmatprep.subr.mxu0 0.0
  %753 = vmatpush2.msra.mxu0 0.0
  %754 = vmatprep.subr.mxu0 0.0
  %755 = vmatpush2.msra.mxu0 0.0
  %756 = vmatprep.subr.mxu0 0.0
  %757 = vmatpush2.msra.mxu0 0.0
  %758 = vmatprep.subr.mxu0 0.0
  %759 = vmatpush2.msra.mxu0 0.0
  %760 = vmatprep.subr.mxu0 0.0
  %761 = vmatpush2.msra.mxu0 0.0
  %762 = vmatprep.subr.mxu0 0.0
  %763 = vmatpush2.msra.mxu0 0.0
  %764 = vmatprep.subr.mxu0 0.0
  %765 = vmatpush2.msra.mxu0 0.0
  %766 = vmatprep.mubr.f32.mxu0 0.0
  %767 = vmatmul.mubr.f32.gmra.mxu0 %v691
  %v768 = vpop.f32.mrf.mxu0
  %v769 = vadd.f32 0.0, %v768
  %v770 = vpop.f32.mrf.mxu0
  %771 = vmatprep.mubr.f32.mxu0 0.0
  %772 = vmatmul.mubr.f32.gmra.mxu0 %v694
  %v773 = vpop.f32.mrf.mxu0
  %v774 = vadd.f32 0.0, %v773
  %v775 = vpop.f32.mrf.mxu0
  %776 = vmatprep.mubr.f32.mxu0 0.0
  %777 = vmatmul.mubr.f32.gmra.mxu0 %v697
  %v778 = vpop.f32.mrf.mxu0
  %v779 = vadd.f32 0.0, %v778
  %v780 = vpop.f32.mrf.mxu0
  %781 = vmatprep.mubr.f32.mxu0 0.0
  %782 = vmatmul.mubr.f32.gmra.mxu0 %v700
  %v783 = vpop.f32.mrf.mxu0
  %v784 = vadd.f32 0.0, %v783
  %v785 = vpop.f32.mrf.mxu0
  %786 = vdwg.mxu0
  %v787 = vsel %vm352, %v769, -inf
  %v788 = vrot.slane %v787, 4
  %v789 = vmax.f32 %v787, %v788
  %v790 = vrot.slane %v789, 2
  %v791 = vmax.f32 %v789, %v790
  %v792 = vrot.slane %v791, 1
  %v793 = vmax.f32 %v791, %v792
  %v794 = vsel %vm352, %v774, -inf
  %v795 = vrot.slane %v794, 4
  %v796 = vmax.f32 %v794, %v795
  %v797 = vrot.slane %v796, 2
  %v798 = vmax.f32 %v796, %v797
  %v799 = vrot.slane %v798, 1
  %v800 = vmax.f32 %v798, %v799
  %v801 = vsel %vm352, %v779, -inf
  %v802 = vrot.slane %v801, 4
  %v803 = vmax.f32 %v801, %v802
  %v804 = vrot.slane %v803, 2
  %v805 = vmax.f32 %v803, %v804
  %v806 = vrot.slane %v805, 1
  %v807 = vmax.f32 %v805, %v806
  %v808 = vsel %vm352, %v784, -inf
  %v809 = vrot.slane %v808, 4
  %v810 = vmax.f32 %v808, %v809
  %v811 = vrot.slane %v810, 2
  %v812 = vmax.f32 %v810, %v811
  %v813 = vrot.slane %v812, 1
  %v814 = vmax.f32 %v812, %v813
  %v815 = vsub.f32 %v769, %v793
  %v816 = vsub.f32 %v774, %v800
  %v817 = vsub.f32 %v779, %v807
  %v818 = vsub.f32 %v784, %v814
  %v819 = vmul.f32 %v815, 1.442695
  %v820 = vpow.pop %v819
  %v821 = vmul.f32 %v816, 1.442695
  %v822 = vpow.pop %v821
  %v823 = vmul.f32 %v817, 1.442695
  %v824 = vpow.pop %v823
  %v825 = vmul.f32 %v818, 1.442695
  %v826 = vpow.pop %v825
  %v827 = vsel %vm352, %v820, 0.0
  %v828 = vrot.slane %v827, 4
  %v829 = vadd.f32 %v827, %v828
  %v830 = vrot.slane %v829, 2
  %v831 = vadd.f32 %v829, %v830
  %v832 = vrot.slane %v831, 1
  %v833 = vadd.f32 %v831, %v832
  %v834 = vsel %vm352, %v822, 0.0
  %v835 = vrot.slane %v834, 4
  %v836 = vadd.f32 %v834, %v835
  %v837 = vrot.slane %v836, 2
  %v838 = vadd.f32 %v836, %v837
  %v839 = vrot.slane %v838, 1
  %v840 = vadd.f32 %v838, %v839
  %v841 = vsel %vm352, %v824, 0.0
  %v842 = vrot.slane %v841, 4
  %v843 = vadd.f32 %v841, %v842
  %v844 = vrot.slane %v843, 2
  %v845 = vadd.f32 %v843, %v844
  %v846 = vrot.slane %v845, 1
  %v847 = vadd.f32 %v845, %v846
  %v848 = vsel %vm352, %v826, 0.0
  %v849 = vrot.slane %v848, 4
  %v850 = vadd.f32 %v848, %v849
  %v851 = vrot.slane %v850, 2
  %v852 = vadd.f32 %v850, %v851
  %v853 = vrot.slane %v852, 1
  %v854 = vadd.f32 %v852, %v853
  %v855 = vrcp.pop %v833
  %v856 = vrcp.pop %v840
  %v857 = vrcp.pop %v847
  %v858 = vrcp.pop %v854
  %v859 = vmul.f32 %v820, %v855
  %v860 = vmul.f32 %v822, %v856
  %v861 = vmul.f32 %v824, %v857
  %v862 = vmul.f32 %v826, %v858
  %v863 = vunpack.c.l.bf16 %v485
  %v864 = vunpack.c.l.bf16 %v486
  %v865 = vunpack.c.l.bf16 %v487
  %v866 = vunpack.c.l.bf16 %v488
  %868 = vset.pattern.permute.xlu0 0
  %869 = vperm.xlu0 %868, %v859
  %v870 = vpop.permute.xlu0 %869
  %873 = vset.pattern.permute.xlu0 0
  %874 = vperm.xlu0 %873, %v860
  %v875 = vpop.permute.xlu0 %874
  %878 = vset.pattern.permute.xlu0 0
  %879 = vperm.xlu0 %878, %v861
  %v880 = vpop.permute.xlu0 %879
  %883 = vset.pattern.permute.xlu0 0
  %884 = vperm.xlu0 %883, %v862
  %v885 = vpop.permute.xlu0 %884
  %v887 = vmul.f32 %v870, %v863
  %v888 = vmul.f32 %v875, %v864
  %v889 = vmul.f32 %v880, %v865
  %v890 = vmul.f32 %v885, %v866
  %v891 = vsel %vm73, %v887, 0.0
  %v892 = vrot.slane %v891, 4
  %v893 = vadd.f32 %v891, %v892
  %v894 = vrot.slane %v893, 2
  %v895 = vadd.f32 %v893, %v894
  %v896 = vrot.slane %v895, 1
  %v897 = vadd.f32 %v895, %v896
  %v898 = vsel %vm73, %v888, 0.0
  %v899 = vrot.slane %v898, 4
  %v900 = vadd.f32 %v898, %v899
  %v901 = vrot.slane %v900, 2
  %v902 = vadd.f32 %v900, %v901
  %v903 = vrot.slane %v902, 1
  %v904 = vadd.f32 %v902, %v903
  %v905 = vsel %vm73, %v889, 0.0
  %v906 = vrot.slane %v905, 4
  %v907 = vadd.f32 %v905, %v906
  %v908 = vrot.slane %v907, 2
  %v909 = vadd.f32 %v907, %v908
  %v910 = vrot.slane %v909, 1
  %v911 = vadd.f32 %v909, %v910
  %v912 = vsel %vm73, %v890, 0.0
  %v913 = vrot.slane %v912, 4
  %v914 = vadd.f32 %v912, %v913
  %v915 = vrot.slane %v914, 2
  %v916 = vadd.f32 %v914, %v915
  %v917 = vrot.slane %v916, 1
  %v918 = vadd.f32 %v916, %v917
  %v919 = vadd.f32 %v463, %v897
  %v920 = vadd.f32 %v470, %v904
  %v921 = vadd.f32 %v477, %v911
  %v922 = vadd.f32 %v484, %v918
  %v923 = vunpack.c.l.bf16 %v45
  %v925 = vrot.slane %v923, 1
  %v926 = vrot.slane %v923, 2
  %v927 = vrot.slane %v923, 3
  %v932 = vadd.f32 %v919, %v923
  %v933 = vadd.f32 %v920, %v925
  %v934 = vadd.f32 %v921, %v926
  %v935 = vadd.f32 %v922, %v927
  %v936 = vld [vmem:[%s11] sm:$0xff]
  %v937 = vld [vmem:[%s11 + $0x8] sm:$0xff]
  %v938 = vld [vmem:[%s11 + $0x10] sm:$0xff]
  %v939 = vld [vmem:[%s11 + $0x18] sm:$0xff]
  %v940 = vld [vmem:[%s12] sm:$0x1]
  %v942 = vlaneseq
  %v943 = vshrl.u32 %v942, 7
  %v944 = vsub.s32 0, %v943
  %v945 = vrot.slane %v940, %v944
  %v951 = vrot.slane %v933, 7
  %vm952 = vcmask 1041409
  %v953 = vsel %vm952, %v951, %v932
  %v954 = vrot.slane %v934, 6
  %vm955 = vcmask 1042434
  %v956 = vsel %vm955, %v954, %v953
  %v957 = vrot.slane %v935, 5
  %vm958 = vcmask 1043459
  %v959 = vsel %vm958, %v957, %v956
  %v960 = vsel %vm73, %v959, 0
  %962 = vmatprep.subr.mxu0 0.0
  %963 = vmatpush1.msra.mxu0 0.0
  %964 = vmatprep.subr.mxu0 0.0
  %965 = vmatpush1.msra.mxu0 0.0
  %966 = vmatprep.subr.mxu0 0.0
  %967 = vmatpush1.msra.mxu0 0.0
  %968 = vmatprep.subr.mxu0 0.0
  %969 = vmatpush1.msra.mxu0 0.0
  %970 = vmatprep.subr.mxu0 0.0
  %971 = vmatpush1.msra.mxu0 0.0
  %972 = vmatprep.subr.mxu0 0.0
  %973 = vmatpush1.msra.mxu0 0.0
  %974 = vmatprep.subr.mxu0 0.0
  %975 = vmatpush1.msra.mxu0 0.0
  %976 = vmatprep.subr.mxu0 0.0
  %977 = vmatpush1.msra.mxu0 0.0
  %978 = vmatprep.subr.mxu0 0.0
  %979 = vmatpush1.msra.mxu0 0.0
  %980 = vmatprep.subr.mxu0 0.0
  %981 = vmatpush1.msra.mxu0 0.0
  %982 = vmatprep.subr.mxu0 0.0
  %983 = vmatpush1.msra.mxu0 0.0
  %984 = vmatprep.subr.mxu0 0.0
  %985 = vmatpush1.msra.mxu0 0.0
  %986 = vmatprep.subr.mxu0 0.0
  %987 = vmatpush1.msra.mxu0 %v939
  %988 = vmatprep.subr.mxu0 0.0
  %989 = vmatpush1.msra.mxu0 %v938
  %990 = vmatprep.subr.mxu0 0.0
  %991 = vmatpush1.msra.mxu0 %v937
  %992 = vmatprep.subr.mxu0 0.0
  %993 = vmatpush1.msra.mxu0 %v936
  %994 = vmatprep.subr.mxu0 0.0
  %995 = vmatpush2.msra.mxu0 0.0
  %996 = vmatprep.subr.mxu0 0.0
  %997 = vmatpush2.msra.mxu0 0.0
  %998 = vmatprep.subr.mxu0 0.0
  %999 = vmatpush2.msra.mxu0 0.0
  %1000 = vmatprep.subr.mxu0 0.0
  %1001 = vmatpush2.msra.mxu0 0.0
  %1002 = vmatprep.subr.mxu0 0.0
  %1003 = vmatpush2.msra.mxu0 0.0
  %1004 = vmatprep.subr.mxu0 0.0
  %1005 = vmatpush2.msra.mxu0 0.0
  %1006 = vmatprep.subr.mxu0 0.0
  %1007 = vmatpush2.msra.mxu0 0.0
  %1008 = vmatprep.subr.mxu0 0.0
  %1009 = vmatpush2.msra.mxu0 0.0
  %1010 = vmatprep.subr.mxu0 0.0
  %1011 = vmatpush2.msra.mxu0 0.0
  %1012 = vmatprep.subr.mxu0 0.0
  %1013 = vmatpush2.msra.mxu0 0.0
  %1014 = vmatprep.subr.mxu0 0.0
  %1015 = vmatpush2.msra.mxu0 0.0
  %1016 = vmatprep.subr.mxu0 0.0
  %1017 = vmatpush2.msra.mxu0 0.0
  %1018 = vmatprep.subr.mxu0 0.0
  %1019 = vmatpush2.msra.mxu0 0.0
  %1020 = vmatprep.subr.mxu0 0.0
  %1021 = vmatpush2.msra.mxu0 0.0
  %1022 = vmatprep.subr.mxu0 0.0
  %1023 = vmatpush2.msra.mxu0 0.0
  %1024 = vmatprep.subr.mxu0 0.0
  %1025 = vmatpush2.msra.mxu0 0.0
  %1026 = vmatprep.mubr.f32.mxu0 0.0
  %1027 = vmatmul.mubr.f32.gmra.mxu0 %v960
  %v1028 = vpop.f32.mrf.mxu0
  %v1029 = vadd.f32 %v945, %v1028
  %v1030 = vpop.f32.mrf.mxu0
  %1031 = vdwg.mxu0
  %1032 = vst [vmem:[%s13] sm:$0xf] %v1029
  // Predicated region
  $region54: #{simple_classifier.1} parent=0 // pred_check
    _
  $region55: #{simple_classifier.1} parent=0 // pred_check_branch
    %1034 = sbr.rel (0) target = $region57
  $region56: #{simple_classifier.1} parent=0 // pred_region
    _
  $region57: #{simple_classifier.1} parent=0 // pred_fallthru
    _
  // Predicated region
  $region58: #{simple_classifier.1} parent=0 // pred_check
    _
  $region59: #{simple_classifier.1} parent=0 // pred_check_branch
    %1036 = sbr.rel (0) target = $region61
  $region60: #{simple_classifier.1} parent=0 // pred_region
    _
  $region61: #{simple_classifier.1} parent=0 // pred_fallthru
    _

</llo_original>
